<compile_context>
chip_gen: v5e
topology: v5e:2x2
jax: 0.10.0
libtpu: 0.0.40
codegen_flags: <defaults>
</compile_context>

<pallas_src>
import math

import jax
import jax.numpy as jnp
from jax.experimental import pallas as pl
from jax.experimental.pallas import tpu as pltpu


def _round_up(a: int, b: int) -> int:
    return ((a + b - 1) // b) * b


# -----------------------------------------------------------------------------
# Kernel body.  Grid = (row tiles i [parallel], hidden tiles j [arbitrary]).
#   x_ref:   (TM, D)   row-tile of flattened input (compute dtype)
#   wfc_ref: (D, TH)   c_fc weight slice (pre-transposed to "x @ W" form)
#   bfc_ref: (1, TH)   c_fc bias slice (f32)
#   wpj_ref: (TH, D)   c_proj weight slice (pre-transposed)
#   bpj_ref: (1, D)    c_proj bias (f32)
#   acc_ref: (TM, D)   f32 VMEM accumulator for c_proj partial sums
# -----------------------------------------------------------------------------
def mlp_kernel(x_ref, wfc_ref, bfc_ref, wpj_ref, bpj_ref, o_ref, acc_ref):
    j = pl.program_id(1)

    @pl.when(j == 0)
    def _():
        acc_ref[...] = jnp.zeros_like(acc_ref)

    # c_fc partial: (TM, D) @ (D, TH) on the MXU, f32 accumulation.
    h = jnp.dot(x_ref[...], wfc_ref[...],
                preferred_element_type=jnp.float32) + bfc_ref[...]

    # new_gelu (tanh approximation, identical to the PyTorch reference), kept in f32.
    # NOTE (review): this VPU/EUP work is filler under MXU slack for real D — do not
    # micro-optimize; the binding resources are MXU throughput and weight DMA bandwidth.
    c = math.sqrt(2.0 / math.pi)
    g = 0.5 * h * (1.0 + jnp.tanh(c * (h + 0.044715 * h * h * h)))

    # c_proj partial: (TM, TH) @ (TH, D) accumulated into the f32 scratch.
    acc_ref[...] += jnp.dot(g.astype(wpj_ref.dtype), wpj_ref[...],
                            preferred_element_type=jnp.float32)

    @pl.when(j == pl.num_programs(1) - 1)
    def _():
        # dropout: eval-mode identity.
        # TODO(synk): training-mode dropout (pltpu.prng_random_bits mask) not implemented.
        o_ref[...] = (acc_ref[...] + bpj_ref[...]).astype(o_ref.dtype)


# -----------------------------------------------------------------------------
# One-time (load-time) parameter preparation — hoisted out of the forward path so
# the transpose/cast/pad HBM traffic is not paid per call.
# PyTorch nn.Linear convention: w_fc (H, D), b_fc (H,), w_proj (D, H), b_proj (D,).
# -----------------------------------------------------------------------------
def prepare_mlp_params(w_fc, b_fc, w_proj, b_proj, compute_dtype=jnp.bfloat16):
    H, D = w_fc.shape
    Hp = _round_up(H, 128)
    cdt = jnp.dtype(compute_dtype)

    wfc_t = jnp.asarray(w_fc).T.astype(cdt)          # (D, H)
    wpj_t = jnp.asarray(w_proj).T.astype(cdt)        # (H, D)
    bfc2 = jnp.asarray(b_fc).reshape(1, H).astype(jnp.float32)
    bpj2 = jnp.asarray(b_proj).reshape(1, D).astype(jnp.float32)

    if Hp != H:
        # Zero padding of the hidden dim is exact: padded h = 0, gelu(0) = 0, and the
        # padded W_proj rows are zero, so padded lanes contribute nothing to the output.
        wfc_t = jnp.pad(wfc_t, ((0, 0), (0, Hp - H)))
        bfc2 = jnp.pad(bfc2, ((0, 0), (0, Hp - H)))
        wpj_t = jnp.pad(wpj_t, ((0, Hp - H), (0, 0)))

    return dict(wfc_t=wfc_t, bfc=bfc2, wpj_t=wpj_t, bpj=bpj2,
                D=D, H=H, Hp=Hp, compute_dtype=cdt)


# -----------------------------------------------------------------------------
# Chip-generation-aware defaults.
# -----------------------------------------------------------------------------
def _hw_config():
    """Returns (tm_target, th_target, vmem_capacity_bytes, multi_tensorcore)."""
    kind = ""
    try:
        kind = jax.devices()[0].device_kind.lower()
    except Exception:
        pass
    vmem_cap = None
    try:
        vmem_cap = int(pltpu.get_tpu_info().vmem_capacity_bytes)
    except Exception:
        vmem_cap = None

    is_v7 = ("7" in kind) or (vmem_cap is not None and vmem_cap <= (64 << 20))
    if vmem_cap is None:
        vmem_cap = (64 << 20) if is_v7 else (128 << 20)

    if is_v7:
        # crossover ~310 flop/byte, 64 MiB VMEM per TC, 2 TensorCores per chip.
        return 512, 512, vmem_cap, True
    if "v6" in kind:
        # crossover ~650-700 flop/byte, 128 MiB VMEM.
        return 1024, 512, vmem_cap, False
    # v5e / unknown: crossover ~240 flop/byte, 128 MiB VMEM.
    return 512, 512, vmem_cap, False


# -----------------------------------------------------------------------------
# Forward wrapper.  x: (..., D); params from prepare_mlp_params.
# -----------------------------------------------------------------------------
def mlp_pallas(x, params, *, tm=None, th=None, out_dtype=None):
    cdt = params["compute_dtype"]
    D, Hp = params["D"], params["Hp"]
    out_dtype = cdt if out_dtype is None else jnp.dtype(out_dtype)
    assert x.shape[-1] == D

    lead = x.shape[:-1]
    M = 1
    for s in lead:
        M *= s

    tm_target, th_target, vmem_cap, multi_tc = _hw_config()
    if tm is not None:
        tm_target = tm
    if th is not None:
        th_target = th
    if D >= 8192 and vmem_cap <= (64 << 20):
        th_target = min(th_target, 256)      # v7x + very wide models

    cbytes = cdt.itemsize
    obytes = jnp.dtype(out_dtype).itemsize
    # Row-tile alignment follows sublane packing of the compute dtype (8 f32 / 16 bf16).
    row_align = 8 * max(1, 4 // cbytes)

    # Hidden tile: largest multiple of 128 that divides Hp and is <= th_target.
    th_eff = 128
    for cand in range(max(th_target - th_target % 128, 128), 127, -128):
        if Hp % cand == 0:
            th_eff = cand
            break

    # Row tile: as big as the (aligned) problem and the target allow.
    tm_eff = min(_round_up(tm_target, row_align), _round_up(M, row_align))
    if multi_tc:
        # Keep >= 2 row tiles so both TensorCores (parallel i axis) get work.
        half = _round_up(-(-M // 2), row_align)
        tm_eff = max(row_align, min(tm_eff, half))

    def vmem_est(tm_, th_):
        return (2 * (tm_ * D * cbytes          # x row-tile (double buffered)
                     + D * th_ * cbytes        # W_fc^T tile
                     + 8 * th_ * 4             # b_fc tile (sublane padded)
                     + th_ * D * cbytes        # W_proj^T tile
                     + 8 * D * 4               # b_proj tile
                     + tm_ * D * obytes)       # out tile
                + tm_ * D * 4                  # f32 accumulator
                + 3 * tm_ * th_ * 4)           # h / gelu f32 temporaries

    budget = int(0.85 * vmem_cap)
    while vmem_est(tm_eff, th_eff) > budget and tm_eff > row_align:
        tm_eff = max(row_align, _round_up(tm_eff // 2, row_align))
    while vmem_est(tm_eff, th_eff) > budget and th_eff > 128:
        new_th = th_eff
        for cand in range(th_eff - 128, 127, -128):
            if Hp % cand == 0:
                new_th = cand
                break
        if new_th == th_eff:
            break
        th_eff = new_th
    n_h = Hp // th_eff

    Mp = _round_up(M, tm_eff)
    n_row = Mp // tm_eff

    # Per-call host prep: only the activation (flatten / pad ragged rows / cast).
    x2 = x.reshape(M, D)
    if Mp != M:
        x2 = jnp.pad(x2, ((0, Mp - M), (0, 0)))
    x2 = x2.astype(cdt)

    est = vmem_est(tm_eff, th_eff)
    vmem_limit = int(min(max(1.25 * est, 32 << 20), 0.9 * vmem_cap))

    wbytes = (params["wfc_t"].size + params["wpj_t"].size) * cbytes
    bbytes = (params["bfc"].size + params["bpj"].size) * 4
    cost = pl.CostEstimate(
        flops=4 * Mp * D * Hp,                        # two matmuls: 2*M*D*H each
        transcendentals=Mp * Hp,                      # tanh in new_gelu
        bytes_accessed=(Mp * D * cbytes               # activation stream
                        + n_row * (wbytes + bbytes)   # weights re-streamed per row tile
                        + Mp * D * obytes),           # output writeback
    )

    out = pl.pallas_call(
        mlp_kernel,
        out_shape=jax.ShapeDtypeStruct((Mp, D), out_dtype),
        grid_spec=pltpu.PrefetchScalarGridSpec(
            num_scalar_prefetch=0,
            grid=(n_row, n_h),
            in_specs=[
                pl.BlockSpec((tm_eff, D), lambda i, j: (i, 0)),   # x row-tile (revisited over j)
                pl.BlockSpec((D, th_eff), lambda i, j: (0, j)),   # W_fc^T hidden slice
                pl.BlockSpec((1, th_eff), lambda i, j: (0, j)),   # b_fc hidden slice
                pl.BlockSpec((th_eff, D), lambda i, j: (j, 0)),   # W_proj^T hidden slice
                pl.BlockSpec((1, D), lambda i, j: (0, 0)),        # b_proj
            ],
            out_specs=pl.BlockSpec((tm_eff, D), lambda i, j: (i, 0)),
            scratch_shapes=[pltpu.VMEM((tm_eff, D), jnp.float32)],
        ),
        compiler_params=pltpu.CompilerParams(
            dimension_semantics=("parallel", "arbitrary"),
            vmem_limit_bytes=vmem_limit),
        cost_estimate=cost,
    )(x2, params["wfc_t"], params["bfc"], params["wpj_t"], params["bpj"])

    return out[:M].reshape(*lead, D)


def _ref_mlp(x, w_fc, b_fc, w_proj, b_proj):
    h = jnp.einsum("btd,hd->bth", x, w_fc) + b_fc
    c = math.sqrt(2.0 / math.pi)
    g = 0.5 * h * (1.0 + jnp.tanh(c * (h + 0.044715 * h ** 3)))
    return jnp.einsum("bth,dh->btd", g, w_proj) + b_proj


if __name__ == "__main__":
    # Small GPT-style config: n_embd=32 -> hidden=128; batch=2, seq=8.
    B, T, D = 2, 8, 32
    H = 4 * D

    key = jax.random.PRNGKey(0)
    kx, k1, k2, k3, k4 = jax.random.split(key, 5)

    x = jax.random.normal(kx, (B, T, D), dtype=jnp.float32)

    # Deterministic PyTorch-style Linear init: U(-1/sqrt(fan_in), 1/sqrt(fan_in)).
    bnd_fc = 1.0 / math.sqrt(D)
    bnd_pj = 1.0 / math.sqrt(H)
    w_fc = jax.random.uniform(k1, (H, D), jnp.float32, -bnd_fc, bnd_fc)
    b_fc = jax.random.uniform(k2, (H,), jnp.float32, -bnd_fc, bnd_fc)
    w_proj = jax.random.uniform(k3, (D, H), jnp.float32, -bnd_pj, bnd_pj)
    b_proj = jax.random.uniform(k4, (D,), jnp.float32, -bnd_pj, bnd_pj)

    ref = _ref_mlp(x, w_fc, b_fc, w_proj, b_proj)

    # f32 compute/output path. Tolerance is modest (not bit-tight) because default MXU
    # precision may lower f32 dot to bf16 passes (per review correctness note).
    p_f32 = prepare_mlp_params(w_fc, b_fc, w_proj, b_proj, compute_dtype=jnp.float32)
    out_f32 = jax.block_until_ready(mlp_pallas(x, p_f32))
    assert out_f32.shape == (B, T, D) and out_f32.dtype == jnp.float32
    assert jnp.allclose(out_f32, ref, atol=2e-2, rtol=2e-2), "f32 path mismatch vs reference"

    # Default path: bf16 MXU operands, f32 accumulate, bf16 output (cast in caller if needed).
    # prepare_mlp_params is the one-time, load-time weight prep (hoisted transpose/cast).
    p_bf16 = prepare_mlp_params(w_fc, b_fc, w_proj, b_proj)
    out_bf16 = jax.block_until_ready(mlp_pallas(x, p_bf16))
    assert out_bf16.shape == (B, T, D) and out_bf16.dtype == jnp.bfloat16
    assert jnp.allclose(out_bf16.astype(jnp.float32), ref, atol=7e-2, rtol=7e-2), \
        "bf16 path mismatch vs reference"

    # Ragged-M case (M = 14, not a multiple of the row tile): exercises pad + slice path,
    # reusing the already-prepared bf16 params.
    xr = jax.random.normal(kx, (2, 7, D), dtype=jnp.float32)
    out_r = jax.block_until_ready(mlp_pallas(xr, p_bf16))
    ref_r = _ref_mlp(xr, w_fc, b_fc, w_proj, b_proj)
    assert out_r.shape == (2, 7, D)
    assert jnp.allclose(out_r.astype(jnp.float32), ref_r, atol=7e-2, rtol=7e-2), \
        "ragged-M mismatch vs reference"

    # Non-128-multiple hidden dim (H = 96 -> padded to 128): exercises the pad-H path
    # that replaced the old "th_eff = H" fallback.
    Hs = 96
    w_fc_s = jax.random.uniform(k1, (Hs, D), jnp.float32, -bnd_fc, bnd_fc)
    b_fc_s = jax.random.uniform(k2, (Hs,), jnp.float32, -bnd_fc, bnd_fc)
    w_pj_s = jax.random.uniform(k3, (D, Hs), jnp.float32, -1.0 / math.sqrt(Hs),
                                1.0 / math.sqrt(Hs))
    b_pj_s = jax.random.uniform(k4, (D,), jnp.float32, -1.0 / math.sqrt(Hs),
                                1.0 / math.sqrt(Hs))
    p_pad = prepare_mlp_params(w_fc_s, b_fc_s, w_pj_s, b_pj_s)
    out_p = jax.block_until_ready(mlp_pallas(x, p_pad))
    ref_p = _ref_mlp(x, w_fc_s, b_fc_s, w_pj_s, b_pj_s)
    assert out_p.shape == (B, T, D)
    assert jnp.allclose(out_p.astype(jnp.float32), ref_p, atol=7e-2, rtol=7e-2), \
        "padded-H mismatch vs reference"

    print("KERNEL_OK")
</pallas_src>

<mosaic_0001>
module attributes {stable_mosaic.version = 11 : i64} {
  func.func @mlp_kernel(%arg0: i32, %arg1: i32, %arg2: memref<16x32xf32, #tpu.memory_space<vmem>>, %arg3: memref<32x128xf32, #tpu.memory_space<vmem>>, %arg4: memref<1x128xf32, #tpu.memory_space<vmem>>, %arg5: memref<128x32xf32, #tpu.memory_space<vmem>>, %arg6: memref<1x32xf32, #tpu.memory_space<vmem>>, %arg7: memref<16x32xf32, #tpu.memory_space<vmem>>, %arg8: memref<16x32xf32, #tpu.memory_space<vmem>>) attributes {dimension_semantics = [#tpu.dimension_semantics<parallel>, #tpu.dimension_semantics<arbitrary>], iteration_bounds = array<i64: 1, 1>, scalar_prefetch = 0 : i64, scratch_operands = 1 : i64, tpu.core_type = #tpu.core_type<tc>, window_params = [{transform_indices = @transform_0, window_bounds = array<i64: 16, 32>}, {transform_indices = @transform_1, window_bounds = array<i64: 32, 128>}, {transform_indices = @transform_2, window_bounds = array<i64: 1, 128>}, {transform_indices = @transform_3, window_bounds = array<i64: 128, 32>}, {pipeline_mode = #tpu.pipeline_mode<synchronous>, transform_indices = @transform_4, window_bounds = array<i64: 1, 32>}, {transform_indices = @transform_5, window_bounds = array<i64: 16, 32>}]} {
    %c0_i32 = arith.constant 0 : i32
    %0 = arith.cmpi eq, %arg1, %c0_i32 : i32
    %1 = arith.extui %0 : i1 to i32
    %c0_i32_0 = arith.constant 0 : i32
    %2 = arith.cmpi ne, %1, %c0_i32_0 : i32
    scf.if %2 {
      %cst_19 = arith.constant 0.000000e+00 : f32
      %30 = vector.broadcast %cst_19 : f32 to vector<16x32xf32>
      %c0_20 = arith.constant 0 : index
      %c0_21 = arith.constant 0 : index
      %31 = vector.load %arg8[%c0_20, %c0_21] : memref<16x32xf32, #tpu.memory_space<vmem>>, vector<16x32xf32>
      tpu.vector_store %arg8[%c0_20, %c0_21], %30 {strides = array<i32>} : memref<16x32xf32, #tpu.memory_space<vmem>>, vector<16x32xf32>,
    } else {
    }
    %c0 = arith.constant 0 : index
    %c0_1 = arith.constant 0 : index
    %3 = vector.load %arg2[%c0, %c0_1] : memref<16x32xf32, #tpu.memory_space<vmem>>, vector<16x32xf32>
    %c0_2 = arith.constant 0 : index
    %c0_3 = arith.constant 0 : index
    %4 = vector.load %arg3[%c0_2, %c0_3] : memref<32x128xf32, #tpu.memory_space<vmem>>, vector<32x128xf32>
    %cst = arith.constant dense<0.000000e+00> : vector<16x128xf32>
    %5 = tpu.matmul %3, %4, %cst {dimension_numbers = #tpu.dot_dimension_numbers<[1], [0], [0], [1], [0, 0, 1, 1], [], []>} : vector<16x32xf32>, vector<32x128xf32>, vector<16x128xf32> -> vector<16x128xf32>
    %c0_4 = arith.constant 0 : index
    %c0_5 = arith.constant 0 : index
    %6 = vector.load %arg4[%c0_4, %c0_5] : memref<1x128xf32, #tpu.memory_space<vmem>>, vector<1x128xf32>
    %7 = vector.broadcast %6 : vector<1x128xf32> to vector<16x128xf32>
    %8 = arith.addf %5, %7 : vector<16x128xf32>
    %cst_6 = arith.constant 5.000000e-01 : f32
    %9 = vector.broadcast %cst_6 : f32 to vector<16x128xf32>
    %10 = arith.mulf %9, %8 : vector<16x128xf32>
    %cst_7 = arith.constant 4.471500e-02 : f32
    %11 = vector.broadcast %cst_7 : f32 to vector<16x128xf32>
    %12 = arith.mulf %11, %8 : vector<16x128xf32>
    %13 = arith.mulf %12, %8 : vector<16x128xf32>
    %14 = arith.mulf %13, %8 : vector<16x128xf32>
    %15 = arith.addf %8, %14 : vector<16x128xf32>
    %cst_8 = arith.constant 0.797884583 : f32
    %16 = vector.broadcast %cst_8 : f32 to vector<16x128xf32>
    %17 = arith.mulf %16, %15 : vector<16x128xf32>
    %18 = math.tanh %17 : vector<16x128xf32>
    %cst_9 = arith.constant 1.000000e+00 : f32
    %19 = vector.broadcast %cst_9 : f32 to vector<16x128xf32>
    %20 = arith.addf %19, %18 : vector<16x128xf32>
    %21 = arith.mulf %10, %20 : vector<16x128xf32>
    %c0_10 = arith.constant 0 : index
    %c0_11 = arith.constant 0 : index
    %22 = vector.load %arg8[%c0_10, %c0_11] : memref<16x32xf32, #tpu.memory_space<vmem>>, vector<16x32xf32>
    %c0_12 = arith.constant 0 : index
    %c0_13 = arith.constant 0 : index
    %23 = vector.load %arg5[%c0_12, %c0_13] : memref<128x32xf32, #tpu.memory_space<vmem>>, vector<128x32xf32>
    %cst_14 = arith.constant dense<0.000000e+00> : vector<16x32xf32>
    %24 = tpu.matmul %21, %23, %cst_14 {dimension_numbers = #tpu.dot_dimension_numbers<[1], [0], [0], [1], [0, 0, 1, 1], [], []>} : vector<16x128xf32>, vector<128x32xf32>, vector<16x32xf32> -> vector<16x32xf32>
    %25 = arith.addf %22, %24 : vector<16x32xf32>
    %c0_15 = arith.constant 0 : index
    %c0_16 = arith.constant 0 : index
    %26 = vector.load %arg8[%c0_15, %c0_16] : memref<16x32xf32, #tpu.memory_space<vmem>>, vector<16x32xf32>
    tpu.vector_store %arg8[%c0_15, %c0_16], %25 {strides = array<i32>} : memref<16x32xf32, #tpu.memory_space<vmem>>, vector<16x32xf32>,
    %c0_i32_17 = arith.constant 0 : i32
    %27 = arith.cmpi eq, %arg1, %c0_i32_17 : i32
    %28 = arith.extui %27 : i1 to i32
    %c0_i32_18 = arith.constant 0 : i32
    %29 = arith.cmpi ne, %28, %c0_i32_18 : i32
    scf.if %29 {
      %c0_19 = arith.constant 0 : index
      %c0_20 = arith.constant 0 : index
      %30 = vector.load %arg8[%c0_19, %c0_20] : memref<16x32xf32, #tpu.memory_space<vmem>>, vector<16x32xf32>
      %c0_21 = arith.constant 0 : index
      %c0_22 = arith.constant 0 : index
      %31 = vector.load %arg6[%c0_21, %c0_22] : memref<1x32xf32, #tpu.memory_space<vmem>>, vector<1x32xf32>
      %32 = vector.broadcast %31 : vector<1x32xf32> to vector<16x32xf32>
      %33 = arith.addf %30, %32 : vector<16x32xf32>
      %c0_23 = arith.constant 0 : index
      %c0_24 = arith.constant 0 : index
      %34 = vector.load %arg7[%c0_23, %c0_24] : memref<16x32xf32, #tpu.memory_space<vmem>>, vector<16x32xf32>
      tpu.vector_store %arg7[%c0_23, %c0_24], %33 {strides = array<i32>} : memref<16x32xf32, #tpu.memory_space<vmem>>, vector<16x32xf32>,
    } else {
    }
    return
  }
  func.func @transform_0(%arg0: i32, %arg1: i32) -> (i32, i32) {
    %c0_i32 = arith.constant 0 : i32
    %c0_i32_0 = arith.constant 0 : i32
    return %arg0, %c0_i32 : i32, i32
  }
  func.func @transform_1(%arg0: i32, %arg1: i32) -> (i32, i32) {
    %c0_i32 = arith.constant 0 : i32
    %c0_i32_0 = arith.constant 0 : i32
    return %c0_i32, %arg1 : i32, i32
  }
  func.func @transform_2(%arg0: i32, %arg1: i32) -> (i32, i32) {
    %c0_i32 = arith.constant 0 : i32
    %c0_i32_0 = arith.constant 0 : i32
    return %c0_i32, %arg1 : i32, i32
  }
  func.func @transform_3(%arg0: i32, %arg1: i32) -> (i32, i32) {
    %c0_i32 = arith.constant 0 : i32
    %c0_i32_0 = arith.constant 0 : i32
    return %arg1, %c0_i32 : i32, i32
  }
  func.func @transform_4(%arg0: i32, %arg1: i32) -> (i32, i32) {
    %c0_i32 = arith.constant 0 : i32
    %c0_i32_0 = arith.constant 0 : i32
    %c0_i32_1 = arith.constant 0 : i32
    return %c0_i32, %c0_i32_0 : i32, i32
  }
  func.func @transform_5(%arg0: i32, %arg1: i32) -> (i32, i32) {
    %c0_i32 = arith.constant 0 : i32
    %c0_i32_0 = arith.constant 0 : i32
    return %arg0, %c0_i32 : i32, i32
  }
}

</mosaic_0001>

<llo_original>
// kernel: tpu_custom_call.1
$region0: #{tpu_custom_call.1}
  #allocation0 [shape = 'u32[]', space=smem, size = 0x4, offset = 0x4, fixed_abs, tag = 'smem constant byte address 0x4 - core index']
  #allocation1 [shape = 'u32[72,128]{1,0:T(1,128)}', space=vmem, size = 0x9000, scoped, tag = 'internal scratch']
  #allocation2 [shape = 'f32[16,32]{1,0:T(8,128)}', space=vmem, size = 0x2000, scoped, tag = 'scratch operand']
  %s0 = inlined_call_operand.vmem [shape: f32[16,32], index: 0, kind: input, shape index: {}]
  %s1 = inlined_call_operand.vmem [shape: f32[32,128], index: 1, kind: input, shape index: {}]
  %s2 = inlined_call_operand.vmem [shape: f32[1,128], index: 2, kind: input, shape index: {}]
  %s3 = inlined_call_operand.vmem [shape: f32[128,32], index: 3, kind: input, shape index: {}]
  %s4 = inlined_call_operand.vmem [shape: f32[1,32], index: 4, kind: input, shape index: {}]
  %s5 = inlined_call_operand.hbm [shape: f32[16,32], index: 5, kind: output, shape index: {}]
  %s6 = sld [smem:[#allocation0]]
  $region38: #{tpu_custom_call.1} parent=0
    _
  %s8 = ssub.s32 1, %s6
  %s9 = scalar_select 0, %s8, %s6
  $region1: #{tpu_custom_call.1} parent=0
    #allocation3 [shape = 'u8[8192]{0}', space=vmem, size = 0x2000, scoped, tag = 'output window, operand 0, single buffered']
    #allocation4 [shape = 's32[1]{0}', space=sflag, size = 0x4, scoped, tag = 'scoped memory for tpu_custom_call.1']
    %10 = vsyncpa [#allocation4], 0
    // Predicated region
    $region2: #{tpu_custom_call.1} parent=1 // pred_check
      _
    $region3: #{tpu_custom_call.1} parent=1 // pred_check_branch
      %12 = sbr.rel (0) target = $region5
    $region4: #{tpu_custom_call.1} parent=1 // pred_region
      _
    $region5: #{tpu_custom_call.1} parent=1 // pred_fallthru
      _
    // Predicated region
    $region6: #{tpu_custom_call.1} parent=1 // pred_check
      _
    $region7: #{tpu_custom_call.1} parent=1 // pred_check_branch
      %14 = sbr.rel (0) target = $region9
    $region8: #{tpu_custom_call.1} parent=1 // pred_region
      _
    $region9: #{tpu_custom_call.1} parent=1 // pred_fallthru
      _
    // Predicated region
    $region10: #{tpu_custom_call.1} parent=1 // pred_check
      _
    $region11: #{tpu_custom_call.1} parent=1 // pred_check_branch
      %16 = sbr.rel (0) target = $region13
    $region12: #{tpu_custom_call.1} parent=1 // pred_region
      _
    $region13: #{tpu_custom_call.1} parent=1 // pred_fallthru
      _
    // Predicated region
    $region14: #{tpu_custom_call.1} parent=1 // pred_check
      _
    $region15: #{tpu_custom_call.1} parent=1 // pred_check_branch
      %18 = sbr.rel (0) target = $region17
    $region16: #{tpu_custom_call.1} parent=1 // pred_region
      _
    $region17: #{tpu_custom_call.1} parent=1 // pred_fallthru
      _
    // Predicated region
    $region18: #{tpu_custom_call.1} parent=1 // pred_check
      _
    $region19: #{tpu_custom_call.1} parent=1 // pred_check_branch
      %20 = sbr.rel (0) target = $region21
    $region20: #{tpu_custom_call.1} parent=1 // pred_region
      _
    $region21: #{tpu_custom_call.1} parent=1 // pred_fallthru
      _
    %p21 = scmp.eq.s32.totalorder 0, 0
    // Predicated region
    $region22: #{tpu_custom_call.1} parent=1 // pred_check
      %p22 = pneg %p21
    $region23: #{tpu_custom_call.1} parent=1 // pred_check_branch
      %24 = sbr.rel (%p22) target = $region25
    $region24: #{tpu_custom_call.1} parent=1 // pred_region
      %vm25 = vcmask 261120
      %26 = vst.msk [vmem:[#allocation2] sm:$0xff] %vm25, 0.0
      %27 = vst.msk [vmem:[#allocation2 + $0x8] sm:$0xff] %vm25, 0.0
    $region25: #{tpu_custom_call.1} parent=1 // pred_fallthru
      _
    %v28 = vld [vmem:[%s0] sm:$0xff]
    %v29 = vld [vmem:[%s0 + $0x8] sm:$0xff]
    %v30 = vld [vmem:[%s1] sm:$0xff]
    %v31 = vld [vmem:[%s1 + $0x8] sm:$0xff]
    %v32 = vld [vmem:[%s1 + $0x10] sm:$0xff]
    %v33 = vld [vmem:[%s1 + $0x18] sm:$0xff]
    %v34 = vld [vmem:[%s2] sm:$0x1]
    %v36 = vperm.slane %v34, 0
    %vm38 = vcmask 261120
    %v40 = vsel %vm38, %v28, 0
    %v43 = vsel %vm38, %v29, 0
    %45 = vmatpush.msra.mxu0 0.0
    %46 = vmatpush.msra.mxu0 0.0
    %47 = vmatpush.msra.mxu0 0.0
    %48 = vmatpush.msra.mxu0 0.0
    %49 = vmatpush.msra.mxu0 0.0
    %50 = vmatpush.msra.mxu0 0.0
    %51 = vmatpush.msra.mxu0 0.0
    %52 = vmatpush.msra.mxu0 0.0
    %53 = vmatpush.msra.mxu0 0.0
    %54 = vmatpush.msra.mxu0 0.0
    %55 = vmatpush.msra.mxu0 0.0
    %56 = vmatpush.msra.mxu0 0.0
    %57 = vmatpush.msra.mxu0 %v33
    %58 = vmatpush.msra.mxu0 %v32
    %59 = vmatpush.msra.mxu0 %v31
    %60 = vmatpush.msra.mxu0 %v30
    %61 = vmatmul.f32.gmra.mxu0 %v40
    %v62 = vpop.f32.mrf.mxu0
    %v63 = vadd.f32 %v36, %v62
    %64 = vmatmul.f32.gmra.mxu0 %v43
    %v65 = vpop.f32.mrf.mxu0
    %v66 = vadd.f32 %v36, %v65
    %67 = vdwg.mxu0
    %v68 = vmul.f32 %v63, 0.5
    %v69 = vmul.f32 %v66, 0.5
    %v70 = vmul.f32 %v63, 0.044715
    %v71 = vmul.f32 %v66, 0.044715
    %v72 = vmul.f32 %v70, %v63
    %v73 = vmul.f32 %v71, %v66
    %v74 = vmul.f32 %v72, %v63
    %v75 = vmul.f32 %v73, %v66
    %v76 = vadd.f32 %v63, %v74
    %v77 = vadd.f32 %v66, %v75
    %v78 = vmul.f32 %v76, 0.7978846
    %v79 = vmul.f32 %v77, 0.7978846
    %v80 = vtanh.pop %v78
    %v81 = vtanh.pop %v79
    %v82 = vadd.f32 %v80, 1.0
    %v83 = vadd.f32 %v81, 1.0
    %v84 = vmul.f32 %v68, %v82
    %v85 = vmul.f32 %v69, %v83
    %v86 = vld [vmem:[#allocation2] sm:$0xff]
    %v87 = vld [vmem:[#allocation2 + $0x8] sm:$0xff]
    %v88 = vld [vmem:[%s3] sm:$0xff]
    %v89 = vld [vmem:[%s3 + $0x8] sm:$0xff]
    %v90 = vld [vmem:[%s3 + $0x10] sm:$0xff]
    %v91 = vld [vmem:[%s3 + $0x18] sm:$0xff]
    %v92 = vld [vmem:[%s3 + $0x20] sm:$0xff]
    %v93 = vld [vmem:[%s3 + $0x28] sm:$0xff]
    %v94 = vld [vmem:[%s3 + $0x30] sm:$0xff]
    %v95 = vld [vmem:[%s3 + $0x38] sm:$0xff]
    %v96 = vld [vmem:[%s3 + $0x40] sm:$0xff]
    %v97 = vld [vmem:[%s3 + $0x48] sm:$0xff]
    %v98 = vld [vmem:[%s3 + $0x50] sm:$0xff]
    %v99 = vld [vmem:[%s3 + $0x58] sm:$0xff]
    %v100 = vld [vmem:[%s3 + $0x60] sm:$0xff]
    %v101 = vld [vmem:[%s3 + $0x68] sm:$0xff]
    %v102 = vld [vmem:[%s3 + $0x70] sm:$0xff]
    %v103 = vld [vmem:[%s3 + $0x78] sm:$0xff]
    %104 = vmatpush.msra.mxu0 %v103
    %105 = vmatpush.msra.mxu0 %v102
    %106 = vmatpush.msra.mxu0 %v101
    %107 = vmatpush.msra.mxu0 %v100
    %108 = vmatpush.msra.mxu0 %v99
    %109 = vmatpush.msra.mxu0 %v98
    %110 = vmatpush.msra.mxu0 %v97
    %111 = vmatpush.msra.mxu0 %v96
    %112 = vmatpush.msra.mxu0 %v95
    %113 = vmatpush.msra.mxu0 %v94
    %114 = vmatpush.msra.mxu0 %v93
    %115 = vmatpush.msra.mxu0 %v92
    %116 = vmatpush.msra.mxu0 %v91
    %117 = vmatpush.msra.mxu0 %v90
    %118 = vmatpush.msra.mxu0 %v89
    %119 = vmatpush.msra.mxu0 %v88
    %120 = vmatmul.f32.gmra.mxu0 %v84
    %v121 = vpop.f32.mrf.mxu0
    %v122 = vadd.f32 0.0, %v121
    %123 = vmatmul.f32.gmra.mxu0 %v85
    %v124 = vpop.f32.mrf.mxu0
    %v125 = vadd.f32 0.0, %v124
    %126 = vdwg.mxu0
    %v127 = vadd.f32 %v86, %v122
    %v128 = vadd.f32 %v87, %v125
    %129 = vst.msk [vmem:[#allocation2] sm:$0xff] %vm38, %v127
    %130 = vst.msk [vmem:[#allocation2 + $0x8] sm:$0xff] %vm38, %v128
    // Predicated region
    $region26: #{tpu_custom_call.1} parent=1 // pred_check
      %p131 = pneg %p21
    $region27: #{tpu_custom_call.1} parent=1 // pred_check_branch
      %133 = sbr.rel (%p131) target = $region29
    $region28: #{tpu_custom_call.1} parent=1 // pred_region
      %v134 = vld [vmem:[#allocation2] sm:$0xff]
      %v135 = vld [vmem:[#allocation2 + $0x8] sm:$0xff]
      %v136 = vld [vmem:[%s4] sm:$0x1]
      %v138 = vperm.slane %v136, 0
      %v140 = vadd.f32 %v134, %v138
      %v141 = vadd.f32 %v135, %v138
      %142 = vst.msk [vmem:[#allocation3] sm:$0xff] %vm38, %v140
      %143 = vst.msk [vmem:[#allocation3 + $0x8] sm:$0xff] %vm38, %v141
    $region29: #{tpu_custom_call.1} parent=1 // pred_fallthru
      _
    // Predicated region
    $region30: #{tpu_custom_call.1} parent=1 // pred_check
      _
    $region31: #{tpu_custom_call.1} parent=1 // pred_check_branch
      %145 = sbr.rel (0) target = $region33
    $region32: #{tpu_custom_call.1} parent=1 // pred_region
      %147 = vsyncadd [#allocation4], 0
      %s148 = sshll.u32 [#allocation3], 4
      %s149 = int_to_ptr.vmem [resolvable:$true] %s148
      %s150 = sshll.u32 %s5, 4
      %s151 = int_to_ptr.hbm [resolvable:$true] %s150
      %156 = dma.vmem_to_hbm [thread:$0]  %s149, 256, %s151, [#allocation4], 128, 128, 8
    $region33: #{tpu_custom_call.1} parent=1 // pred_fallthru
      _
    // Predicated region
    $region34: #{tpu_custom_call.1} parent=1 // pred_check
      _
    $region35: #{tpu_custom_call.1} parent=1 // pred_check_branch
      %158 = sbr.rel (0) target = $region37
    $region36: #{tpu_custom_call.1} parent=1 // pred_region
      %160 = dma.done [#allocation4], 256
    $region37: #{tpu_custom_call.1} parent=1 // pred_fallthru
      _
    %161 = vsyncpa [#allocation4], 1

</llo_original>
